<compile_context>
chip_gen: v5e
topology: v5e:2x2
jax: 0.10.0
libtpu: 0.0.40
codegen_flags: <defaults>
</compile_context>

<pallas_src>
import jax
import jax.numpy as jnp
import numpy as np
from jax.experimental import pallas as pl
from jax.experimental.pallas import tpu as pltpu


def _round_up(x, m):
    return (x + m - 1) // m * m


def _make_embed_kernel(tile, a_pad):
    def kernel(idx_ref, table_ref, out_ref):
        # idx_ref:   (tile, 1)    int32 action ids for this tile of tokens
        # table_ref: (a_pad, H)   padded embedding table (VMEM-resident)
        # out_ref:   (tile, H)
        idx = idx_ref[...]                                             # (tile, 1)
        iota = jax.lax.broadcasted_iota(jnp.int32, (tile, a_pad), 1)   # (tile, a_pad)
        onehot = (idx == iota).astype(table_ref.dtype)                 # exact 0/1
        # One-hot @ table == exact gather; runs as one MXU matmul per tile.
        out_ref[...] = jnp.dot(
            onehot, table_ref[...], preferred_element_type=jnp.float32
        ).astype(out_ref.dtype)

    return kernel


def action_embedder_pallas(actions, table, *, tile=128):
    """actions: int array of arbitrary shape; table: (num_actions, hidden)."""
    num_actions, hidden = table.shape
    orig_shape = actions.shape

    flat = actions.reshape(-1).astype(jnp.int32)
    n_tok = flat.shape[0]

    # Tile of tokens per grid step (>=8 for sublane alignment; don't over-pad
    # tiny inputs).
    tile = max(8, min(tile, _round_up(n_tok, 8)))
    n_pad = _round_up(n_tok, tile)
    flat = jnp.pad(flat, (0, n_pad - n_tok))        # pad tokens -> gather row 0, sliced off below
    idx2d = flat.reshape(n_pad, 1)

    # Lane-align the one-hot / contraction dim; padded rows are never selected.
    a_pad = _round_up(max(num_actions, 128), 128)
    table_p = jnp.pad(table, ((0, a_pad - num_actions), (0, 0)))

    grid = (n_pad // tile,)
    out = pl.pallas_call(
        _make_embed_kernel(tile, a_pad),
        out_shape=jax.ShapeDtypeStruct((n_pad, hidden), table.dtype),
        grid_spec=pltpu.PrefetchScalarGridSpec(
            num_scalar_prefetch=0,
            grid=grid,
            in_specs=[
                pl.BlockSpec((tile, 1), lambda i: (i, 0)),     # per-tile action ids
                pl.BlockSpec((a_pad, hidden), lambda i: (0, 0)),  # whole table, constant index
            ],
            out_specs=pl.BlockSpec((tile, hidden), lambda i: (i, 0)),
        ),
        compiler_params=pltpu.CompilerParams(
            dimension_semantics=("parallel",),
        ),
    )(idx2d, table_p)
    return out[:n_tok].reshape(*orig_shape, hidden)


if __name__ == "__main__":
    key = jax.random.PRNGKey(0)
    num_actions, hidden = 18, 128   # hidden chosen lane-aligned (multiple of 128)
    B, S = 4, 64                    # 256 tokens -> 2 parallel grid steps of 128

    k_a, k_w = jax.random.split(key)
    actions = jax.random.randint(k_a, (B, S), 0, num_actions, dtype=jnp.int32)
    # nn.Embedding default init is N(0, 1)
    table = jax.random.normal(k_w, (num_actions, hidden), jnp.float32)

    out = jax.block_until_ready(action_embedder_pallas(actions, table))
    ref = jnp.take(table, actions, axis=0)   # == embedding_table(actions)

    assert out.shape == (B, S, hidden)
    np.testing.assert_allclose(np.asarray(out), np.asarray(ref), rtol=1e-6, atol=1e-6)
    print("KERNEL_OK")
</pallas_src>

<mosaic_0001>
module attributes {stable_mosaic.version = 11 : i64} {
  func.func @kernel(%arg0: i32, %arg1: memref<128x1xi32, #tpu.memory_space<vmem>>, %arg2: memref<128x128xf32, #tpu.memory_space<vmem>>, %arg3: memref<128x128xf32, #tpu.memory_space<vmem>>) attributes {dimension_semantics = [#tpu.dimension_semantics<parallel>], iteration_bounds = array<i64: 2>, scalar_prefetch = 0 : i64, scratch_operands = 0 : i64, tpu.core_type = #tpu.core_type<tc>, window_params = [{transform_indices = @transform_0, window_bounds = array<i64: 128, 1>}, {pipeline_mode = #tpu.pipeline_mode<synchronous>, transform_indices = @transform_1, window_bounds = array<i64: 128, 128>}, {transform_indices = @transform_2, window_bounds = array<i64: 128, 128>}]} {
    %c0 = arith.constant 0 : index
    %c0_0 = arith.constant 0 : index
    %0 = vector.load %arg1[%c0, %c0_0] : memref<128x1xi32, #tpu.memory_space<vmem>>, vector<128x1xi32>
    %1 = tpu.iota {dimensions = array<i32: 1>} : vector<128x128xi32>
    %2 = vector.broadcast %0 : vector<128x1xi32> to vector<128x128xi32>
    %3 = arith.cmpi eq, %2, %1 : vector<128x128xi32>
    %4 = arith.extui %3 : vector<128x128xi1> to vector<128x128xi32>
    %5 = arith.sitofp %4 : vector<128x128xi32> to vector<128x128xf32>
    %c0_1 = arith.constant 0 : index
    %c0_2 = arith.constant 0 : index
    %6 = vector.load %arg2[%c0_1, %c0_2] : memref<128x128xf32, #tpu.memory_space<vmem>>, vector<128x128xf32>
    %cst = arith.constant dense<0.000000e+00> : vector<128x128xf32>
    %7 = tpu.matmul %5, %6, %cst {dimension_numbers = #tpu.dot_dimension_numbers<[1], [0], [0], [1], [0, 0, 1, 1], [], []>} : vector<128x128xf32>, vector<128x128xf32>, vector<128x128xf32> -> vector<128x128xf32>
    %c0_3 = arith.constant 0 : index
    %c0_4 = arith.constant 0 : index
    %8 = vector.load %arg3[%c0_3, %c0_4] : memref<128x128xf32, #tpu.memory_space<vmem>>, vector<128x128xf32>
    tpu.vector_store %arg3[%c0_3, %c0_4], %7 {strides = array<i32>} : memref<128x128xf32, #tpu.memory_space<vmem>>, vector<128x128xf32>,
    return
  }
  func.func @transform_0(%arg0: i32) -> (i32, i32) {
    %c0_i32 = arith.constant 0 : i32
    %c0_i32_0 = arith.constant 0 : i32
    return %arg0, %c0_i32 : i32, i32
  }
  func.func @transform_1(%arg0: i32) -> (i32, i32) {
    %c0_i32 = arith.constant 0 : i32
    %c0_i32_0 = arith.constant 0 : i32
    %c0_i32_1 = arith.constant 0 : i32
    return %c0_i32, %c0_i32_0 : i32, i32
  }
  func.func @transform_2(%arg0: i32) -> (i32, i32) {
    %c0_i32 = arith.constant 0 : i32
    %c0_i32_0 = arith.constant 0 : i32
    return %arg0, %c0_i32 : i32, i32
  }
}

</mosaic_0001>

<llo_original>
// kernel: tpu_custom_call.1
$region0: #{tpu_custom_call.1}
  #allocation0 [shape = 'u32[]', space=smem, size = 0x4, offset = 0x4, fixed_abs, tag = 'smem constant byte address 0x4 - core index']
  #allocation1 [shape = 'u32[72,128]{1,0:T(1,128)}', space=vmem, size = 0x9000, scoped, tag = 'internal scratch']
  %s0 = inlined_call_operand.vmem [shape: s32[256,1], index: 0, kind: input, shape index: {}]
  %s1 = inlined_call_operand.vmem [shape: f32[128,128], index: 1, kind: input, shape index: {}]
  %s2 = inlined_call_operand.hbm [shape: f32[256,128], index: 2, kind: output, shape index: {}]
  %s3 = sld [smem:[#allocation0]]
  $region41: #{tpu_custom_call.1} parent=0
    _
  %s5 = ssub.s32 1, %s3
  %s6 = scalar_select 0, %s5, %s3
  $region1: #{tpu_custom_call.1} parent=0
    #allocation2 [shape = 'u8[131072]{0}', space=vmem, size = 0x20000, scoped, tag = 'output window, operand 0']
    #allocation3 [shape = 's32[2]{0}', space=sflag, size = 0x8, scoped, tag = 'scoped memory for tpu_custom_call.1']
    %7 = vsyncpa [#allocation3], 0
    %s8 = scalar_lea.sflag [#allocation3], 1
    %9 = vsyncpa %s8, 0
    loop: start=0, step=1, limit=4
    $region2: #{tpu_custom_call.1} parent=1 // loop_pre_header
      _
    $region3: #{tpu_custom_call.1} parent=1 // loop_header
      %s11 = sphi 0, %s15
      %p12 = scmp.ge.s32.totalorder %s11, 4
      %s21 = sphi 0, %s23
      %s24 = sphi 0, %s21
      %s25 = sphi 0, %s24
      %s41 = sphi 0, %s25
      %s45 = sphi 0, %s45
      %s47 = sphi 0, %s45
      %s48 = sphi 0, %s47
      %s62 = sphi 0, %s48
      %s68 = sphi 0, %s70
      %s71 = sphi 0, %s68
      %s72 = sphi 0, %s71
      %s88 = sphi 0, %s72
    $region4: #{tpu_custom_call.1} parent=1 // loop_header_branch
      %14 = sbr.rel (%p12) target = $region8
    $region5: #{tpu_custom_call.1} parent=1 // loop_body
      %s16 = ssub.s32 %s11, 1
      %s17 = ssub.s32 %s11, 2
      %s18 = sadd.s32 %s11, 1
      %s19 = ssub.s32 %s11, %s18
      %p20 = scmp.eq.s32.totalorder %s19, 0
      %s22 = sadd.s32 %s21, 1
      %s23 = scalar_select %p20, %s21, %s22
      %p26 = pneg %p20
      %p27 = scmp.eq.s32.totalorder %s11, 1
      %p28 = por %p26, %p27
      %p29 = scmp.ne.s32.totalorder %s21, %s24
      %p30 = scmp.eq.s32.totalorder %s11, 0
      %p31 = por %p29, %p30
      %p32 = scmp.ne.s32.totalorder %s21, %s24
      %p33 = scmp.eq.s32.totalorder %s16, 1
      %p34 = por %p32, %p33
      %p35 = scmp.ne.s32.totalorder %s24, %s25
      %p36 = scmp.eq.s32.totalorder %s16, 0
      %p37 = por %p35, %p36
      %p38 = scmp.ne.s32.totalorder %s24, %s25
      %p39 = scmp.eq.s32.totalorder %s17, 1
      %p40 = por %p38, %p39
      %p42 = scmp.ne.s32.totalorder %s25, %s41
      %p43 = scmp.eq.s32.totalorder %s17, 0
      %p44 = por %p42, %p43
      %s46 = sadd.s32 %s45, 1
      %p49 = scmp.eq.s32.totalorder %s11, 1
      %p50 = scmp.ne.s32.totalorder %s45, %s47
      %p51 = scmp.eq.s32.totalorder %s11, 0
      %p52 = por %p50, %p51
      %p53 = scmp.ne.s32.totalorder %s45, %s47
      %p54 = scmp.eq.s32.totalorder %s16, 1
      %p55 = por %p53, %p54
      %p56 = scmp.ne.s32.totalorder %s47, %s48
      %p57 = scmp.eq.s32.totalorder %s16, 0
      %p58 = por %p56, %p57
      %p59 = scmp.ne.s32.totalorder %s47, %s48
      %p60 = scmp.eq.s32.totalorder %s17, 1
      %p61 = por %p59, %p60
      %p63 = scmp.ne.s32.totalorder %s48, %s62
      %p64 = scmp.eq.s32.totalorder %s17, 0
      %p65 = por %p63, %p64
      %s66 = ssub.s32 %s11, %s18
      %p67 = scmp.eq.s32.totalorder %s66, 0
      %s69 = sadd.s32 %s68, 1
      %s70 = scalar_select %p67, %s68, %s69
      %p73 = pneg %p67
      %p74 = scmp.eq.s32.totalorder %s11, 1
      %p75 = por %p73, %p74
      %p76 = scmp.ne.s32.totalorder %s68, %s71
      %p77 = scmp.eq.s32.totalorder %s11, 0
      %p78 = por %p76, %p77
      %p79 = scmp.ne.s32.totalorder %s68, %s71
      %p80 = scmp.eq.s32.totalorder %s16, 1
      %p81 = por %p79, %p80
      %p82 = scmp.ne.s32.totalorder %s71, %s72
      %p83 = scmp.eq.s32.totalorder %s16, 0
      %p84 = por %p82, %p83
      %p85 = scmp.ne.s32.totalorder %s71, %s72
      %p86 = scmp.eq.s32.totalorder %s17, 1
      %p87 = por %p85, %p86
      %p89 = scmp.ne.s32.totalorder %s72, %s88
      %p90 = scmp.eq.s32.totalorder %s17, 0
      %p91 = por %p89, %p90
      %p92 = scmp.le.s32.totalorder 1, %s11
      %p93 = scmp.lt.s32.totalorder %s11, 3
      %p94 = pnand %p92, %p93
      %p95 = pneg %p94
      // Predicated region
      $region9: #{tpu_custom_call.1} parent=5 // pred_check
        _
      $region10: #{tpu_custom_call.1} parent=5 // pred_check_branch
        %97 = sbr.rel (%p94) target = $region12
      $region11: #{tpu_custom_call.1} parent=5 // pred_region
        %s98 = ssub.s32 %s11, 1
        // Predicated region
        $region13: #{tpu_custom_call.1} parent=11 // pred_check
          %p99 = pneg %p58
        $region14: #{tpu_custom_call.1} parent=11 // pred_check_branch
          %101 = sbr.rel (%p99) target = $region16
        $region15: #{tpu_custom_call.1} parent=11 // pred_region
          _
        $region16: #{tpu_custom_call.1} parent=11 // pred_fallthru
          _
      $region12: #{tpu_custom_call.1} parent=5 // pred_fallthru
        _
      %p102 = scmp.lt.s32.totalorder %s11, 2
      // Predicated region
      $region17: #{tpu_custom_call.1} parent=5 // pred_check
        %p103 = pneg %p102
      $region18: #{tpu_custom_call.1} parent=5 // pred_check_branch
        %105 = sbr.rel (%p103) target = $region20
      $region19: #{tpu_custom_call.1} parent=5 // pred_region
        // Predicated region
        $region21: #{tpu_custom_call.1} parent=19 // pred_check
          %p106 = pneg %p31
        $region22: #{tpu_custom_call.1} parent=19 // pred_check_branch
          %108 = sbr.rel (%p106) target = $region24
        $region23: #{tpu_custom_call.1} parent=19 // pred_region
          %s109 = smul.u32 16, %s11
          %p110 = scmp.lt.s32.totalorder %s109, 31
          %s111 = scalar_select %p110, %s109, 31
          %s112 = smul.addr %s111, 8
          %s113 = scalar_lea.vmem %s0, %s112
          %s114 = smul.u32 16, %s11
        $region24: #{tpu_custom_call.1} parent=19 // pred_fallthru
          _
      $region20: #{tpu_custom_call.1} parent=5 // pred_fallthru
        _
      %p115 = scmp.le.s32.totalorder 1, %s11
      %p116 = scmp.lt.s32.totalorder %s11, 3
      %p117 = pnand %p115, %p116
      %p118 = pneg %p117
      // Predicated region
      $region25: #{tpu_custom_call.1} parent=5 // pred_check
        _
      $region26: #{tpu_custom_call.1} parent=5 // pred_check_branch
        %120 = sbr.rel (%p117) target = $region28
      $region27: #{tpu_custom_call.1} parent=5 // pred_region
        %s121 = ssub.s32 %s11, 1
        %s122 = smul.u32 16, %s16
        %p123 = scmp.lt.s32.totalorder %s122, 31
        %s124 = scalar_select %p123, %s122, 31
        %s125 = smul.addr %s124, 8
        %s126 = scalar_lea.vmem %s0, %s125
        %p127 = pneg %p37
        %p128 = pneg %p34
        %p129 = pneg %p58
        %p130 = pneg %p55
        %p131 = pneg %p84
        %p132 = pneg %p81
        %s133 = sand.u32 %s71, 1
        %s134 = scalar_lea.sflag [#allocation3], %s133
        %s135 = sand.u32 %s71, 1
        %s136 = smul.addr %s135, 128
        %s137 = scalar_lea.vmem [#allocation2], %s136
        %s138 = smul.u32 16, %s16
        %p139 = scmp.lt.s32.totalorder %s138, 31
        %s140 = scalar_select %p139, %s138, 31
        %s141 = smul.addr %s140, 8
        %s142 = scalar_lea.vmem %s0, %s141
        %s143 = smul.u32 16, %s16
        %s144 = smul.u32 16, %s16
        %v145 = vld [vmem:[%s142] sm:$0xff]
        %v146 = vld [vmem:[%s142 + $0x8] sm:$0xff]
        %v147 = vld [vmem:[%s142 + $0x10] sm:$0xff]
        %v148 = vld [vmem:[%s142 + $0x18] sm:$0xff]
        %v149 = vld [vmem:[%s142 + $0x20] sm:$0xff]
        %v150 = vld [vmem:[%s142 + $0x28] sm:$0xff]
        %v151 = vld [vmem:[%s142 + $0x30] sm:$0xff]
        %v152 = vld [vmem:[%s142 + $0x38] sm:$0xff]
        %v153 = vld [vmem:[%s142 + $0x40] sm:$0xff]
        %v154 = vld [vmem:[%s142 + $0x48] sm:$0xff]
        %v155 = vld [vmem:[%s142 + $0x50] sm:$0xff]
        %v156 = vld [vmem:[%s142 + $0x58] sm:$0xff]
        %v157 = vld [vmem:[%s142 + $0x60] sm:$0xff]
        %v158 = vld [vmem:[%s142 + $0x68] sm:$0xff]
        %v159 = vld [vmem:[%s142 + $0x70] sm:$0xff]
        %v160 = vld [vmem:[%s142 + $0x78] sm:$0xff]
        %v161 = vlaneseq
        %v162 = vand.u32 %v161, 127
        %163 = vset.pattern.permute.xlu0 0
        %164 = vperm.xlu0 %163, %v145
        %v165 = vpop.permute.xlu0 %164
        %166 = vset.pattern.permute.xlu0 0
        %167 = vperm.xlu0 %166, %v146
        %v168 = vpop.permute.xlu0 %167
        %169 = vset.pattern.permute.xlu0 0
        %170 = vperm.xlu0 %169, %v147
        %v171 = vpop.permute.xlu0 %170
        %172 = vset.pattern.permute.xlu0 0
        %173 = vperm.xlu0 %172, %v148
        %v174 = vpop.permute.xlu0 %173
        %175 = vset.pattern.permute.xlu0 0
        %176 = vperm.xlu0 %175, %v149
        %v177 = vpop.permute.xlu0 %176
        %178 = vset.pattern.permute.xlu0 0
        %179 = vperm.xlu0 %178, %v150
        %v180 = vpop.permute.xlu0 %179
        %181 = vset.pattern.permute.xlu0 0
        %182 = vperm.xlu0 %181, %v151
        %v183 = vpop.permute.xlu0 %182
        %184 = vset.pattern.permute.xlu0 0
        %185 = vperm.xlu0 %184, %v152
        %v186 = vpop.permute.xlu0 %185
        %187 = vset.pattern.permute.xlu0 0
        %188 = vperm.xlu0 %187, %v153
        %v189 = vpop.permute.xlu0 %188
        %190 = vset.pattern.permute.xlu0 0
        %191 = vperm.xlu0 %190, %v154
        %v192 = vpop.permute.xlu0 %191
        %193 = vset.pattern.permute.xlu0 0
        %194 = vperm.xlu0 %193, %v155
        %v195 = vpop.permute.xlu0 %194
        %196 = vset.pattern.permute.xlu0 0
        %197 = vperm.xlu0 %196, %v156
        %v198 = vpop.permute.xlu0 %197
        %199 = vset.pattern.permute.xlu0 0
        %200 = vperm.xlu0 %199, %v157
        %v201 = vpop.permute.xlu0 %200
        %202 = vset.pattern.permute.xlu0 0
        %203 = vperm.xlu0 %202, %v158
        %v204 = vpop.permute.xlu0 %203
        %205 = vset.pattern.permute.xlu0 0
        %206 = vperm.xlu0 %205, %v159
        %v207 = vpop.permute.xlu0 %206
        %208 = vset.pattern.permute.xlu0 0
        %209 = vperm.xlu0 %208, %v160
        %v210 = vpop.permute.xlu0 %209
        %vm211 = vcmp.eq.s32.totalorder %v165, %v162
        %vm212 = vcmp.eq.s32.totalorder %v168, %v162
        %vm213 = vcmp.eq.s32.totalorder %v171, %v162
        %vm214 = vcmp.eq.s32.totalorder %v174, %v162
        %vm215 = vcmp.eq.s32.totalorder %v177, %v162
        %vm216 = vcmp.eq.s32.totalorder %v180, %v162
        %vm217 = vcmp.eq.s32.totalorder %v183, %v162
        %vm218 = vcmp.eq.s32.totalorder %v186, %v162
        %vm219 = vcmp.eq.s32.totalorder %v189, %v162
        %vm220 = vcmp.eq.s32.totalorder %v192, %v162
        %vm221 = vcmp.eq.s32.totalorder %v195, %v162
        %vm222 = vcmp.eq.s32.totalorder %v198, %v162
        %vm223 = vcmp.eq.s32.totalorder %v201, %v162
        %vm224 = vcmp.eq.s32.totalorder %v204, %v162
        %vm225 = vcmp.eq.s32.totalorder %v207, %v162
        %vm226 = vcmp.eq.s32.totalorder %v210, %v162
        %v227 = vsel %vm211, 1, 0
        %v228 = vsel %vm212, 1, 0
        %v229 = vsel %vm213, 1, 0
        %v230 = vsel %vm214, 1, 0
        %v231 = vsel %vm215, 1, 0
        %v232 = vsel %vm216, 1, 0
        %v233 = vsel %vm217, 1, 0
        %v234 = vsel %vm218, 1, 0
        %v235 = vsel %vm219, 1, 0
        %v236 = vsel %vm220, 1, 0
        %v237 = vsel %vm221, 1, 0
        %v238 = vsel %vm222, 1, 0
        %v239 = vsel %vm223, 1, 0
        %v240 = vsel %vm224, 1, 0
        %v241 = vsel %vm225, 1, 0
        %v242 = vsel %vm226, 1, 0
        %v243 = vcvt.s32.f32 %v227
        %v244 = vcvt.s32.f32 %v228
        %v245 = vcvt.s32.f32 %v229
        %v246 = vcvt.s32.f32 %v230
        %v247 = vcvt.s32.f32 %v231
        %v248 = vcvt.s32.f32 %v232
        %v249 = vcvt.s32.f32 %v233
        %v250 = vcvt.s32.f32 %v234
        %v251 = vcvt.s32.f32 %v235
        %v252 = vcvt.s32.f32 %v236
        %v253 = vcvt.s32.f32 %v237
        %v254 = vcvt.s32.f32 %v238
        %v255 = vcvt.s32.f32 %v239
        %v256 = vcvt.s32.f32 %v240
        %v257 = vcvt.s32.f32 %v241
        %v258 = vcvt.s32.f32 %v242
        %v259 = vld [vmem:[%s1] sm:$0xff]
        %v260 = vld [vmem:[%s1 + $0x8] sm:$0xff]
        %v261 = vld [vmem:[%s1 + $0x10] sm:$0xff]
        %v262 = vld [vmem:[%s1 + $0x18] sm:$0xff]
        %v263 = vld [vmem:[%s1 + $0x20] sm:$0xff]
        %v264 = vld [vmem:[%s1 + $0x28] sm:$0xff]
        %v265 = vld [vmem:[%s1 + $0x30] sm:$0xff]
        %v266 = vld [vmem:[%s1 + $0x38] sm:$0xff]
        %v267 = vld [vmem:[%s1 + $0x40] sm:$0xff]
        %v268 = vld [vmem:[%s1 + $0x48] sm:$0xff]
        %v269 = vld [vmem:[%s1 + $0x50] sm:$0xff]
        %v270 = vld [vmem:[%s1 + $0x58] sm:$0xff]
        %v271 = vld [vmem:[%s1 + $0x60] sm:$0xff]
        %v272 = vld [vmem:[%s1 + $0x68] sm:$0xff]
        %v273 = vld [vmem:[%s1 + $0x70] sm:$0xff]
        %v274 = vld [vmem:[%s1 + $0x78] sm:$0xff]
        %275 = vmatpush.msra.mxu0 %v274
        %276 = vmatpush.msra.mxu0 %v273
        %277 = vmatpush.msra.mxu0 %v272
        %278 = vmatpush.msra.mxu0 %v271
        %279 = vmatpush.msra.mxu0 %v270
        %280 = vmatpush.msra.mxu0 %v269
        %281 = vmatpush.msra.mxu0 %v268
        %282 = vmatpush.msra.mxu0 %v267
        %283 = vmatpush.msra.mxu0 %v266
        %284 = vmatpush.msra.mxu0 %v265
        %285 = vmatpush.msra.mxu0 %v264
        %286 = vmatpush.msra.mxu0 %v263
        %287 = vmatpush.msra.mxu0 %v262
        %288 = vmatpush.msra.mxu0 %v261
        %289 = vmatpush.msra.mxu0 %v260
        %290 = vmatpush.msra.mxu0 %v259
        %291 = vmatmul.f32.gmra.mxu0 %v243
        %v292 = vpop.f32.mrf.mxu0
        %v293 = vadd.f32 0.0, %v292
        %294 = vmatmul.f32.gmra.mxu0 %v244
        %v295 = vpop.f32.mrf.mxu0
        %v296 = vadd.f32 0.0, %v295
        %297 = vmatmul.f32.gmra.mxu0 %v245
        %v298 = vpop.f32.mrf.mxu0
        %v299 = vadd.f32 0.0, %v298
        %300 = vmatmul.f32.gmra.mxu0 %v246
        %v301 = vpop.f32.mrf.mxu0
        %v302 = vadd.f32 0.0, %v301
        %303 = vmatmul.f32.gmra.mxu0 %v247
        %v304 = vpop.f32.mrf.mxu0
        %v305 = vadd.f32 0.0, %v304
        %306 = vmatmul.f32.gmra.mxu0 %v248
        %v307 = vpop.f32.mrf.mxu0
        %v308 = vadd.f32 0.0, %v307
        %309 = vmatmul.f32.gmra.mxu0 %v249
        %v310 = vpop.f32.mrf.mxu0
        %v311 = vadd.f32 0.0, %v310
        %312 = vmatmul.f32.gmra.mxu0 %v250
        %v313 = vpop.f32.mrf.mxu0
        %v314 = vadd.f32 0.0, %v313
        %315 = vmatmul.f32.gmra.mxu0 %v251
        %v316 = vpop.f32.mrf.mxu0
        %v317 = vadd.f32 0.0, %v316
        %318 = vmatmul.f32.gmra.mxu0 %v252
        %v319 = vpop.f32.mrf.mxu0
        %v320 = vadd.f32 0.0, %v319
        %321 = vmatmul.f32.gmra.mxu0 %v253
        %v322 = vpop.f32.mrf.mxu0
        %v323 = vadd.f32 0.0, %v322
        %324 = vmatmul.f32.gmra.mxu0 %v254
        %v325 = vpop.f32.mrf.mxu0
        %v326 = vadd.f32 0.0, %v325
        %327 = vmatmul.f32.gmra.mxu0 %v255
        %v328 = vpop.f32.mrf.mxu0
        %v329 = vadd.f32 0.0, %v328
        %330 = vmatmul.f32.gmra.mxu0 %v256
        %v331 = vpop.f32.mrf.mxu0
        %v332 = vadd.f32 0.0, %v331
        %333 = vmatmul.f32.gmra.mxu0 %v257
        %v334 = vpop.f32.mrf.mxu0
        %v335 = vadd.f32 0.0, %v334
        %336 = vmatmul.f32.gmra.mxu0 %v258
        %v337 = vpop.f32.mrf.mxu0
        %v338 = vadd.f32 0.0, %v337
        %339 = vdwg.mxu0
        %340 = vst [vmem:[%s137] sm:$0xff] %v293
        %341 = vst [vmem:[%s137 + $0x8] sm:$0xff] %v296
        %342 = vst [vmem:[%s137 + $0x10] sm:$0xff] %v299
        %343 = vst [vmem:[%s137 + $0x18] sm:$0xff] %v302
        %344 = vst [vmem:[%s137 + $0x20] sm:$0xff] %v305
        %345 = vst [vmem:[%s137 + $0x28] sm:$0xff] %v308
        %346 = vst [vmem:[%s137 + $0x30] sm:$0xff] %v311
        %347 = vst [vmem:[%s137 + $0x38] sm:$0xff] %v314
        %348 = vst [vmem:[%s137 + $0x40] sm:$0xff] %v317
        %349 = vst [vmem:[%s137 + $0x48] sm:$0xff] %v320
        %350 = vst [vmem:[%s137 + $0x50] sm:$0xff] %v323
        %351 = vst [vmem:[%s137 + $0x58] sm:$0xff] %v326
        %352 = vst [vmem:[%s137 + $0x60] sm:$0xff] %v329
        %353 = vst [vmem:[%s137 + $0x68] sm:$0xff] %v332
        %354 = vst [vmem:[%s137 + $0x70] sm:$0xff] %v335
        %355 = vst [vmem:[%s137 + $0x78] sm:$0xff] %v338
        %s356 = sand.u32 %s71, 1
        %s357 = scalar_lea.sflag [#allocation3], %s356
        %s358 = sand.u32 %s71, 1
        %s359 = smul.addr %s358, 128
        %s360 = scalar_lea.vmem [#allocation2], %s359
        // Predicated region
        $region29: #{tpu_custom_call.1} parent=27 // pred_check
          %p361 = pneg %p81
        $region30: #{tpu_custom_call.1} parent=27 // pred_check_branch
          %363 = sbr.rel (%p361) target = $region32
        $region31: #{tpu_custom_call.1} parent=27 // pred_region
          %s364 = smul.u32 16, %s16
          %366 = vsyncadd %s357, 0
          %s367 = smul.addr %s364, 8
          %s368 = scalar_lea.hbm %s2, %s367
          %s369 = sshll.u32 %s360, 4
          %s370 = int_to_ptr.vmem [resolvable:$true] %s369
          %s371 = sshll.u32 %s368, 4
          %s372 = int_to_ptr.hbm [resolvable:$true] %s371
          %377 = dma.vmem_to_hbm [thread:$0]  %s370, 2048, %s372, %s357, 128, 128, 8
        $region32: #{tpu_custom_call.1} parent=27 // pred_fallthru
          _
      $region28: #{tpu_custom_call.1} parent=5 // pred_fallthru
        _
      %p378 = scmp.le.s32.totalorder 2, %s11
      // Predicated region
      $region33: #{tpu_custom_call.1} parent=5 // pred_check
        %p379 = pneg %p378
      $region34: #{tpu_custom_call.1} parent=5 // pred_check_branch
        %381 = sbr.rel (%p379) target = $region36
      $region35: #{tpu_custom_call.1} parent=5 // pred_region
        %s382 = ssub.s32 %s11, 2
        // Predicated region
        $region37: #{tpu_custom_call.1} parent=35 // pred_check
          %p383 = pneg %p87
        $region38: #{tpu_custom_call.1} parent=35 // pred_check_branch
          %385 = sbr.rel (%p383) target = $region40
        $region39: #{tpu_custom_call.1} parent=35 // pred_region
          %s386 = sand.u32 %s72, 1
          %s387 = scalar_lea.sflag [#allocation3], %s386
          %s388 = sand.u32 %s72, 1
          %s389 = smul.addr %s388, 128
          %s390 = scalar_lea.vmem [#allocation2], %s389
          %392 = dma.done %s387, 2048
        $region40: #{tpu_custom_call.1} parent=35 // pred_fallthru
          _
      $region36: #{tpu_custom_call.1} parent=5 // pred_fallthru
        _
    $region6: #{tpu_custom_call.1} parent=1 // loop_footer
      %s15 = sadd.s32 1, %s11
    $region7: #{tpu_custom_call.1} parent=1 // loop_footer_branch
      %10 = sbr.rel target = $region3
    $region8: #{tpu_custom_call.1} parent=1 // loop_exit
      _
    %393 = vsyncpa [#allocation3], 1
    %s394 = scalar_lea.sflag [#allocation3], 1
    %395 = vsyncpa %s394, 1

</llo_original>
